<compile_context>
chip_gen: v7x
topology: tpu7x:2x2x1
jax: 0.10.0
libtpu: 0.0.40
codegen_flags: <defaults>
</compile_context>

<pallas_src>
import functools

import jax
import jax.numpy as jnp
from jax import lax
from jax.experimental import pallas as pl
from jax.experimental.pallas import tpu as pltpu

N_JOINTS = 17
N_COORDS = N_JOINTS * 3          # 51
N_BONES = 15
# Static bone topology (parent, child joint indices) from the PyTorch module.
BONE_P = (0, 0, 1, 2, 5, 5, 6, 7, 8, 5, 6, 11, 12, 13, 14)
BONE_S = (1, 2, 3, 4, 6, 7, 8, 9, 10, 11, 12, 13, 14, 15, 16)


def _v_len_loss_kernel(x_ref, out_ref, acc_ref, *, n_total, ts, ch,
                       tiles_per_par):
    # x_ref  : (51, ts, 128) VMEM tile; row 3*j+c = coord c of joint j,
    #          pose index = (tile_row + sublane) * 128 + lane.
    # out_ref: (1, 1) f32 SMEM block = loss partial of this parallel group.
    # acc_ref: (ch, 128) f32 VMEM scratch accumulator (persists across steps).
    c = pl.program_id(0)
    i = pl.program_id(1)

    @pl.when(i == 0)
    def _init():
        acc_ref[...] = jnp.zeros_like(acc_ref)
        out_ref[0, 0] = jnp.float32(0.0)

    base_row = (c * tiles_per_par + i) * ts
    n_chunks = ts // ch

    # Hoisted broadcasts (JAX does not CSE broadcast_in_dim inside loops).
    sub_iota = lax.broadcasted_iota(jnp.int32, (ch, 128), 0)
    lane_iota = lax.broadcasted_iota(jnp.int32, (ch, 128), 1)
    pose_base = (base_row + sub_iota) * 128 + lane_iota        # (ch, 128)

    def chunk_body(k, acc):
        off = pl.multiple_of(k * ch, ch)

        def bone_len(b):
            # One 3-coordinate slice per joint endpoint (single load each).
            p = x_ref[pl.ds(BONE_P[b] * 3, 3), pl.ds(off, ch), :]
            s = x_ref[pl.ds(BONE_S[b] * 3, 3), pl.ds(off, ch), :]
            d = (p - s).astype(jnp.float32)                    # (3, ch, 128)
            return jnp.sqrt(jnp.sum(d * d, axis=0))            # (ch, 128)

        l0 = bone_len(0)
        s1 = l0
        s2 = l0 * l0
        for b in range(1, N_BONES):
            l = bone_len(b)
            s1 = s1 + l
            s2 = s2 + l * l

        pose = pose_base + off * 128
        valid = pose < n_total
        # Protect only *padded* lanes from 0/0; real degenerate poses keep the
        # reference's NaN behaviour.
        inv = jnp.float32(1.0) / jnp.where(valid, s1, jnp.float32(1.0))
        # sum_b (len_b / (S1/15) - 1)^2  ==  225 * S2 / S1^2 - 15
        sse = (jnp.float32(N_BONES * N_BONES) * s2 * inv * inv
               - jnp.float32(N_BONES))
        sse = jnp.where(valid, sse, jnp.float32(0.0))
        return acc + sse

    partial = lax.fori_loop(0, n_chunks, chunk_body,
                            jnp.zeros((ch, 128), jnp.float32), unroll=True)
    acc_ref[...] = acc_ref[...] + partial

    @pl.when(i == pl.num_programs(1) - 1)
    def _finalize():
        out_ref[0, 0] = (jnp.sum(acc_ref[...])
                         * jnp.float32(1.0 / (n_total * N_BONES)))


def v_len_loss(x, *, ts_max=128):
    """x: (B, 51) or (B, 17, 3), float dtype.  Returns scalar f32 loss.

    ts_max: sublane rows per DMA tile (128 -> ~3.3 MiB f32 blocks, safe on
    v5e/v6e/v7x default scoped VMEM; raise together with vmem_limit_bytes on
    v6e/v7x if desired).
    """
    if x.dtype in (jnp.float32, jnp.bfloat16, jnp.float16):
        xf = x.reshape(-1, N_COORDS)            # keep 16-bit inputs 16-bit
    else:
        xf = x.reshape(-1, N_COORDS).astype(jnp.float32)
    n = xf.shape[0]

    # Sublane-chunk size: 8 poses/row for 4-byte dtypes, 16 for 2-byte dtypes.
    ch = 16 if xf.dtype.itemsize == 2 else 8

    rows = pl.cdiv(n, 128)                      # pose rows of 128 lanes each
    ts_cap = max(ch, (ts_max // ch) * ch)
    ts = min(ts_cap, pl.cdiv(rows, ch) * ch)    # sublanes per DMA tile
    tiles = pl.cdiv(rows, ts)
    num_par = 2 if tiles >= 2 else 1            # v7x: 2 TensorCores
    tiles_per_par = pl.cdiv(tiles, num_par)
    rows_pad = num_par * tiles_per_par * ts
    n_pad = rows_pad * 128

    # Lane+sublane-dense layout: (51, rows_pad, 128) with pose p at
    # [:, p // 128, p % 128].  The pad + transpose + reshape fuse into a single
    # copy under jit.
    # TODO(synk): have the upstream producer emit this (51, N) layout directly
    # so the transpose copy (and the padding) disappear entirely.
    if n_pad != n:
        xf = jnp.pad(xf, ((0, n_pad - n), (0, 0)))
    xt = xf.T.reshape(N_COORDS, rows_pad, 128)

    kernel = functools.partial(_v_len_loss_kernel, n_total=n, ts=ts, ch=ch,
                               tiles_per_par=tiles_per_par)

    partials = pl.pallas_call(
        kernel,
        out_shape=jax.ShapeDtypeStruct((num_par, 1), jnp.float32),
        grid_spec=pltpu.PrefetchScalarGridSpec(
            num_scalar_prefetch=0,
            grid=(num_par, tiles_per_par),
            in_specs=[pl.BlockSpec(
                (N_COORDS, ts, 128),
                lambda c, i: (0, c * tiles_per_par + i, 0))],
            out_specs=pl.BlockSpec(
                (1, 1), lambda c, i: (c, 0),
                memory_space=pltpu.MemorySpace.SMEM),
            scratch_shapes=[pltpu.VMEM((ch, 128), jnp.float32)],
        ),
        compiler_params=pltpu.CompilerParams(
            dimension_semantics=("parallel", "arbitrary")),
    )(xt)
    return jnp.sum(partials)


def v_len_loss_ref(x):
    # Pure-JAX reference mirroring the PyTorch forward.
    j = x.reshape(-1, N_JOINTS, 3).astype(jnp.float32)
    p = j[:, jnp.array(BONE_P), :]
    s = j[:, jnp.array(BONE_S), :]
    blen = jnp.sqrt(jnp.sum((p - s) ** 2, axis=2))             # (N, 15)
    bmean = jnp.mean(blen, axis=1, keepdims=True)              # (N, 1)
    return jnp.mean((blen / bmean - 1.0) ** 2)


if __name__ == "__main__":
    key = jax.random.PRNGKey(0)
    k1, k2 = jax.random.split(key)

    # Small case: 4 poses of 17 joints * 3 coords, flattened (as .view(-1,17,3)
    # implies).
    x1 = jax.random.normal(k1, (4, 51), dtype=jnp.float32)
    loss1 = jax.jit(v_len_loss)(x1)
    jax.block_until_ready(loss1)
    ref1 = v_len_loss_ref(x1)
    assert jnp.allclose(loss1, ref1, rtol=1e-5, atol=1e-5), (loss1, ref1)

    # Moderate case exercising multiple tiles, both grid axes (parallel split)
    # and padded-lane masking, via a small forced tile size.
    x2 = jax.random.normal(k2, (2000, 17, 3), dtype=jnp.float32)
    loss2 = jax.jit(functools.partial(v_len_loss, ts_max=8))(x2)
    jax.block_until_ready(loss2)
    ref2 = v_len_loss_ref(x2)
    assert jnp.allclose(loss2, ref2, rtol=1e-5, atol=1e-5), (loss2, ref2)

    print("KERNEL_OK")
</pallas_src>

<mosaic_0001>
module attributes {stable_mosaic.version = 11 : i64} {
  func.func @_v_len_loss_kernel(%arg0: i32, %arg1: i32, %arg2: memref<51x8x128xf32, #tpu.memory_space<vmem>>, %arg3: memref<1x1xf32, #tpu.memory_space<smem>>, %arg4: memref<8x128xf32, #tpu.memory_space<vmem>>) attributes {dimension_semantics = [#tpu.dimension_semantics<parallel>, #tpu.dimension_semantics<arbitrary>], iteration_bounds = array<i64: 1, 1>, scalar_prefetch = 0 : i64, scratch_operands = 1 : i64, tpu.core_type = #tpu.core_type<tc>, window_params = [{transform_indices = @transform_0, window_bounds = array<i64: 51, 8, 128>}, {transform_indices = @transform_1, window_bounds = array<i64: 1, 1>}]} {
    %c0_i32 = arith.constant 0 : i32
    %0 = arith.cmpi eq, %arg1, %c0_i32 : i32
    %1 = arith.extui %0 : i1 to i32
    %c0_i32_0 = arith.constant 0 : i32
    %2 = arith.cmpi ne, %1, %c0_i32_0 : i32
    scf.if %2 {
      %cst_74 = arith.constant 0.000000e+00 : f32
      %203 = vector.broadcast %cst_74 : f32 to vector<8x128xf32>
      %c0_75 = arith.constant 0 : index
      %c0_76 = arith.constant 0 : index
      %204 = vector.load %arg4[%c0_75, %c0_76] : memref<8x128xf32, #tpu.memory_space<vmem>>, vector<8x128xf32>
      tpu.vector_store %arg4[%c0_75, %c0_76], %203 {strides = array<i32>} : memref<8x128xf32, #tpu.memory_space<vmem>>, vector<8x128xf32>,
      %cst_77 = arith.constant 0.000000e+00 : f32
      %c0_78 = arith.constant 0 : index
      %c0_79 = arith.constant 0 : index
      %205 = memref.load %arg3[%c0_78, %c0_79] : memref<1x1xf32, #tpu.memory_space<smem>>
      memref.store %cst_77, %arg3[%c0_78, %c0_79] : memref<1x1xf32, #tpu.memory_space<smem>>
    } else {
    }
    %c1_i32 = arith.constant 1 : i32
    %3 = arith.muli %arg0, %c1_i32 : i32
    %4 = arith.addi %3, %arg1 : i32
    %c8_i32 = arith.constant 8 : i32
    %5 = arith.muli %4, %c8_i32 : i32
    %6 = tpu.iota {dimensions = array<i32: 0>} : vector<8x128xi32>
    %7 = tpu.iota {dimensions = array<i32: 1>} : vector<8x128xi32>
    %8 = vector.broadcast %5 : i32 to vector<8x128xi32>
    %9 = arith.addi %8, %6 : vector<8x128xi32>
    %c128_i32 = arith.constant 128 : i32
    %10 = vector.broadcast %c128_i32 : i32 to vector<8x128xi32>
    %11 = arith.muli %9, %10 : vector<8x128xi32>
    %12 = arith.addi %11, %7 : vector<8x128xi32>
    %cst = arith.constant 0.000000e+00 : f32
    %13 = vector.broadcast %cst : f32 to vector<8x128xf32>
    %c0_i32_1 = arith.constant 0 : i32
    %c8_i32_2 = arith.constant 8 : i32
    %14 = arith.muli %c0_i32_1, %c8_i32_2 : i32
    %15 = tpu.assume_multiple %14, 8 : i32
    %c0 = arith.constant 0 : index
    %16 = arith.index_cast %15 : i32 to index
    %c0_3 = arith.constant 0 : index
    %17 = vector.load %arg2[%c0, %16, %c0_3] : memref<51x8x128xf32, #tpu.memory_space<vmem>>, vector<3x8x128xf32>
    %c3 = arith.constant 3 : index
    %18 = arith.index_cast %15 : i32 to index
    %c0_4 = arith.constant 0 : index
    %19 = vector.load %arg2[%c3, %18, %c0_4] : memref<51x8x128xf32, #tpu.memory_space<vmem>>, vector<3x8x128xf32>
    %20 = arith.subf %17, %19 : vector<3x8x128xf32>
    %21 = arith.mulf %20, %20 : vector<3x8x128xf32>
    %cst_5 = arith.constant dense<0.000000e+00> : vector<8x128xf32>
    %22 = vector.multi_reduction <add>, %21, %cst_5 [0] : vector<3x8x128xf32> to vector<8x128xf32>
    %23 = math.sqrt %22 : vector<8x128xf32>
    %24 = arith.mulf %23, %23 : vector<8x128xf32>
    %c0_6 = arith.constant 0 : index
    %25 = arith.index_cast %15 : i32 to index
    %c0_7 = arith.constant 0 : index
    %26 = vector.load %arg2[%c0_6, %25, %c0_7] : memref<51x8x128xf32, #tpu.memory_space<vmem>>, vector<3x8x128xf32>
    %c6 = arith.constant 6 : index
    %27 = arith.index_cast %15 : i32 to index
    %c0_8 = arith.constant 0 : index
    %28 = vector.load %arg2[%c6, %27, %c0_8] : memref<51x8x128xf32, #tpu.memory_space<vmem>>, vector<3x8x128xf32>
    %29 = arith.subf %26, %28 : vector<3x8x128xf32>
    %30 = arith.mulf %29, %29 : vector<3x8x128xf32>
    %cst_9 = arith.constant dense<0.000000e+00> : vector<8x128xf32>
    %31 = vector.multi_reduction <add>, %30, %cst_9 [0] : vector<3x8x128xf32> to vector<8x128xf32>
    %32 = math.sqrt %31 : vector<8x128xf32>
    %33 = arith.addf %23, %32 : vector<8x128xf32>
    %34 = arith.mulf %32, %32 : vector<8x128xf32>
    %35 = arith.addf %24, %34 : vector<8x128xf32>
    %c3_10 = arith.constant 3 : index
    %36 = arith.index_cast %15 : i32 to index
    %c0_11 = arith.constant 0 : index
    %37 = vector.load %arg2[%c3_10, %36, %c0_11] : memref<51x8x128xf32, #tpu.memory_space<vmem>>, vector<3x8x128xf32>
    %c9 = arith.constant 9 : index
    %38 = arith.index_cast %15 : i32 to index
    %c0_12 = arith.constant 0 : index
    %39 = vector.load %arg2[%c9, %38, %c0_12] : memref<51x8x128xf32, #tpu.memory_space<vmem>>, vector<3x8x128xf32>
    %40 = arith.subf %37, %39 : vector<3x8x128xf32>
    %41 = arith.mulf %40, %40 : vector<3x8x128xf32>
    %cst_13 = arith.constant dense<0.000000e+00> : vector<8x128xf32>
    %42 = vector.multi_reduction <add>, %41, %cst_13 [0] : vector<3x8x128xf32> to vector<8x128xf32>
    %43 = math.sqrt %42 : vector<8x128xf32>
    %44 = arith.addf %33, %43 : vector<8x128xf32>
    %45 = arith.mulf %43, %43 : vector<8x128xf32>
    %46 = arith.addf %35, %45 : vector<8x128xf32>
    %c6_14 = arith.constant 6 : index
    %47 = arith.index_cast %15 : i32 to index
    %c0_15 = arith.constant 0 : index
    %48 = vector.load %arg2[%c6_14, %47, %c0_15] : memref<51x8x128xf32, #tpu.memory_space<vmem>>, vector<3x8x128xf32>
    %c12 = arith.constant 12 : index
    %49 = arith.index_cast %15 : i32 to index
    %c0_16 = arith.constant 0 : index
    %50 = vector.load %arg2[%c12, %49, %c0_16] : memref<51x8x128xf32, #tpu.memory_space<vmem>>, vector<3x8x128xf32>
    %51 = arith.subf %48, %50 : vector<3x8x128xf32>
    %52 = arith.mulf %51, %51 : vector<3x8x128xf32>
    %cst_17 = arith.constant dense<0.000000e+00> : vector<8x128xf32>
    %53 = vector.multi_reduction <add>, %52, %cst_17 [0] : vector<3x8x128xf32> to vector<8x128xf32>
    %54 = math.sqrt %53 : vector<8x128xf32>
    %55 = arith.addf %44, %54 : vector<8x128xf32>
    %56 = arith.mulf %54, %54 : vector<8x128xf32>
    %57 = arith.addf %46, %56 : vector<8x128xf32>
    %c15 = arith.constant 15 : index
    %58 = arith.index_cast %15 : i32 to index
    %c0_18 = arith.constant 0 : index
    %59 = vector.load %arg2[%c15, %58, %c0_18] : memref<51x8x128xf32, #tpu.memory_space<vmem>>, vector<3x8x128xf32>
    %c18 = arith.constant 18 : index
    %60 = arith.index_cast %15 : i32 to index
    %c0_19 = arith.constant 0 : index
    %61 = vector.load %arg2[%c18, %60, %c0_19] : memref<51x8x128xf32, #tpu.memory_space<vmem>>, vector<3x8x128xf32>
    %62 = arith.subf %59, %61 : vector<3x8x128xf32>
    %63 = arith.mulf %62, %62 : vector<3x8x128xf32>
    %cst_20 = arith.constant dense<0.000000e+00> : vector<8x128xf32>
    %64 = vector.multi_reduction <add>, %63, %cst_20 [0] : vector<3x8x128xf32> to vector<8x128xf32>
    %65 = math.sqrt %64 : vector<8x128xf32>
    %66 = arith.addf %55, %65 : vector<8x128xf32>
    %67 = arith.mulf %65, %65 : vector<8x128xf32>
    %68 = arith.addf %57, %67 : vector<8x128xf32>
    %c15_21 = arith.constant 15 : index
    %69 = arith.index_cast %15 : i32 to index
    %c0_22 = arith.constant 0 : index
    %70 = vector.load %arg2[%c15_21, %69, %c0_22] : memref<51x8x128xf32, #tpu.memory_space<vmem>>, vector<3x8x128xf32>
    %c21 = arith.constant 21 : index
    %71 = arith.index_cast %15 : i32 to index
    %c0_23 = arith.constant 0 : index
    %72 = vector.load %arg2[%c21, %71, %c0_23] : memref<51x8x128xf32, #tpu.memory_space<vmem>>, vector<3x8x128xf32>
    %73 = arith.subf %70, %72 : vector<3x8x128xf32>
    %74 = arith.mulf %73, %73 : vector<3x8x128xf32>
    %cst_24 = arith.constant dense<0.000000e+00> : vector<8x128xf32>
    %75 = vector.multi_reduction <add>, %74, %cst_24 [0] : vector<3x8x128xf32> to vector<8x128xf32>
    %76 = math.sqrt %75 : vector<8x128xf32>
    %77 = arith.addf %66, %76 : vector<8x128xf32>
    %78 = arith.mulf %76, %76 : vector<8x128xf32>
    %79 = arith.addf %68, %78 : vector<8x128xf32>
    %c18_25 = arith.constant 18 : index
    %80 = arith.index_cast %15 : i32 to index
    %c0_26 = arith.constant 0 : index
    %81 = vector.load %arg2[%c18_25, %80, %c0_26] : memref<51x8x128xf32, #tpu.memory_space<vmem>>, vector<3x8x128xf32>
    %c24 = arith.constant 24 : index
    %82 = arith.index_cast %15 : i32 to index
    %c0_27 = arith.constant 0 : index
    %83 = vector.load %arg2[%c24, %82, %c0_27] : memref<51x8x128xf32, #tpu.memory_space<vmem>>, vector<3x8x128xf32>
    %84 = arith.subf %81, %83 : vector<3x8x128xf32>
    %85 = arith.mulf %84, %84 : vector<3x8x128xf32>
    %cst_28 = arith.constant dense<0.000000e+00> : vector<8x128xf32>
    %86 = vector.multi_reduction <add>, %85, %cst_28 [0] : vector<3x8x128xf32> to vector<8x128xf32>
    %87 = math.sqrt %86 : vector<8x128xf32>
    %88 = arith.addf %77, %87 : vector<8x128xf32>
    %89 = arith.mulf %87, %87 : vector<8x128xf32>
    %90 = arith.addf %79, %89 : vector<8x128xf32>
    %c21_29 = arith.constant 21 : index
    %91 = arith.index_cast %15 : i32 to index
    %c0_30 = arith.constant 0 : index
    %92 = vector.load %arg2[%c21_29, %91, %c0_30] : memref<51x8x128xf32, #tpu.memory_space<vmem>>, vector<3x8x128xf32>
    %c27 = arith.constant 27 : index
    %93 = arith.index_cast %15 : i32 to index
    %c0_31 = arith.constant 0 : index
    %94 = vector.load %arg2[%c27, %93, %c0_31] : memref<51x8x128xf32, #tpu.memory_space<vmem>>, vector<3x8x128xf32>
    %95 = arith.subf %92, %94 : vector<3x8x128xf32>
    %96 = arith.mulf %95, %95 : vector<3x8x128xf32>
    %cst_32 = arith.constant dense<0.000000e+00> : vector<8x128xf32>
    %97 = vector.multi_reduction <add>, %96, %cst_32 [0] : vector<3x8x128xf32> to vector<8x128xf32>
    %98 = math.sqrt %97 : vector<8x128xf32>
    %99 = arith.addf %88, %98 : vector<8x128xf32>
    %100 = arith.mulf %98, %98 : vector<8x128xf32>
    %101 = arith.addf %90, %100 : vector<8x128xf32>
    %c24_33 = arith.constant 24 : index
    %102 = arith.index_cast %15 : i32 to index
    %c0_34 = arith.constant 0 : index
    %103 = vector.load %arg2[%c24_33, %102, %c0_34] : memref<51x8x128xf32, #tpu.memory_space<vmem>>, vector<3x8x128xf32>
    %c30 = arith.constant 30 : index
    %104 = arith.index_cast %15 : i32 to index
    %c0_35 = arith.constant 0 : index
    %105 = vector.load %arg2[%c30, %104, %c0_35] : memref<51x8x128xf32, #tpu.memory_space<vmem>>, vector<3x8x128xf32>
    %106 = arith.subf %103, %105 : vector<3x8x128xf32>
    %107 = arith.mulf %106, %106 : vector<3x8x128xf32>
    %cst_36 = arith.constant dense<0.000000e+00> : vector<8x128xf32>
    %108 = vector.multi_reduction <add>, %107, %cst_36 [0] : vector<3x8x128xf32> to vector<8x128xf32>
    %109 = math.sqrt %108 : vector<8x128xf32>
    %110 = arith.addf %99, %109 : vector<8x128xf32>
    %111 = arith.mulf %109, %109 : vector<8x128xf32>
    %112 = arith.addf %101, %111 : vector<8x128xf32>
    %c15_37 = arith.constant 15 : index
    %113 = arith.index_cast %15 : i32 to index
    %c0_38 = arith.constant 0 : index
    %114 = vector.load %arg2[%c15_37, %113, %c0_38] : memref<51x8x128xf32, #tpu.memory_space<vmem>>, vector<3x8x128xf32>
    %c33 = arith.constant 33 : index
    %115 = arith.index_cast %15 : i32 to index
    %c0_39 = arith.constant 0 : index
    %116 = vector.load %arg2[%c33, %115, %c0_39] : memref<51x8x128xf32, #tpu.memory_space<vmem>>, vector<3x8x128xf32>
    %117 = arith.subf %114, %116 : vector<3x8x128xf32>
    %118 = arith.mulf %117, %117 : vector<3x8x128xf32>
    %cst_40 = arith.constant dense<0.000000e+00> : vector<8x128xf32>
    %119 = vector.multi_reduction <add>, %118, %cst_40 [0] : vector<3x8x128xf32> to vector<8x128xf32>
    %120 = math.sqrt %119 : vector<8x128xf32>
    %121 = arith.addf %110, %120 : vector<8x128xf32>
    %122 = arith.mulf %120, %120 : vector<8x128xf32>
    %123 = arith.addf %112, %122 : vector<8x128xf32>
    %c18_41 = arith.constant 18 : index
    %124 = arith.index_cast %15 : i32 to index
    %c0_42 = arith.constant 0 : index
    %125 = vector.load %arg2[%c18_41, %124, %c0_42] : memref<51x8x128xf32, #tpu.memory_space<vmem>>, vector<3x8x128xf32>
    %c36 = arith.constant 36 : index
    %126 = arith.index_cast %15 : i32 to index
    %c0_43 = arith.constant 0 : index
    %127 = vector.load %arg2[%c36, %126, %c0_43] : memref<51x8x128xf32, #tpu.memory_space<vmem>>, vector<3x8x128xf32>
    %128 = arith.subf %125, %127 : vector<3x8x128xf32>
    %129 = arith.mulf %128, %128 : vector<3x8x128xf32>
    %cst_44 = arith.constant dense<0.000000e+00> : vector<8x128xf32>
    %130 = vector.multi_reduction <add>, %129, %cst_44 [0] : vector<3x8x128xf32> to vector<8x128xf32>
    %131 = math.sqrt %130 : vector<8x128xf32>
    %132 = arith.addf %121, %131 : vector<8x128xf32>
    %133 = arith.mulf %131, %131 : vector<8x128xf32>
    %134 = arith.addf %123, %133 : vector<8x128xf32>
    %c33_45 = arith.constant 33 : index
    %135 = arith.index_cast %15 : i32 to index
    %c0_46 = arith.constant 0 : index
    %136 = vector.load %arg2[%c33_45, %135, %c0_46] : memref<51x8x128xf32, #tpu.memory_space<vmem>>, vector<3x8x128xf32>
    %c39 = arith.constant 39 : index
    %137 = arith.index_cast %15 : i32 to index
    %c0_47 = arith.constant 0 : index
    %138 = vector.load %arg2[%c39, %137, %c0_47] : memref<51x8x128xf32, #tpu.memory_space<vmem>>, vector<3x8x128xf32>
    %139 = arith.subf %136, %138 : vector<3x8x128xf32>
    %140 = arith.mulf %139, %139 : vector<3x8x128xf32>
    %cst_48 = arith.constant dense<0.000000e+00> : vector<8x128xf32>
    %141 = vector.multi_reduction <add>, %140, %cst_48 [0] : vector<3x8x128xf32> to vector<8x128xf32>
    %142 = math.sqrt %141 : vector<8x128xf32>
    %143 = arith.addf %132, %142 : vector<8x128xf32>
    %144 = arith.mulf %142, %142 : vector<8x128xf32>
    %145 = arith.addf %134, %144 : vector<8x128xf32>
    %c36_49 = arith.constant 36 : index
    %146 = arith.index_cast %15 : i32 to index
    %c0_50 = arith.constant 0 : index
    %147 = vector.load %arg2[%c36_49, %146, %c0_50] : memref<51x8x128xf32, #tpu.memory_space<vmem>>, vector<3x8x128xf32>
    %c42 = arith.constant 42 : index
    %148 = arith.index_cast %15 : i32 to index
    %c0_51 = arith.constant 0 : index
    %149 = vector.load %arg2[%c42, %148, %c0_51] : memref<51x8x128xf32, #tpu.memory_space<vmem>>, vector<3x8x128xf32>
    %150 = arith.subf %147, %149 : vector<3x8x128xf32>
    %151 = arith.mulf %150, %150 : vector<3x8x128xf32>
    %cst_52 = arith.constant dense<0.000000e+00> : vector<8x128xf32>
    %152 = vector.multi_reduction <add>, %151, %cst_52 [0] : vector<3x8x128xf32> to vector<8x128xf32>
    %153 = math.sqrt %152 : vector<8x128xf32>
    %154 = arith.addf %143, %153 : vector<8x128xf32>
    %155 = arith.mulf %153, %153 : vector<8x128xf32>
    %156 = arith.addf %145, %155 : vector<8x128xf32>
    %c39_53 = arith.constant 39 : index
    %157 = arith.index_cast %15 : i32 to index
    %c0_54 = arith.constant 0 : index
    %158 = vector.load %arg2[%c39_53, %157, %c0_54] : memref<51x8x128xf32, #tpu.memory_space<vmem>>, vector<3x8x128xf32>
    %c45 = arith.constant 45 : index
    %159 = arith.index_cast %15 : i32 to index
    %c0_55 = arith.constant 0 : index
    %160 = vector.load %arg2[%c45, %159, %c0_55] : memref<51x8x128xf32, #tpu.memory_space<vmem>>, vector<3x8x128xf32>
    %161 = arith.subf %158, %160 : vector<3x8x128xf32>
    %162 = arith.mulf %161, %161 : vector<3x8x128xf32>
    %cst_56 = arith.constant dense<0.000000e+00> : vector<8x128xf32>
    %163 = vector.multi_reduction <add>, %162, %cst_56 [0] : vector<3x8x128xf32> to vector<8x128xf32>
    %164 = math.sqrt %163 : vector<8x128xf32>
    %165 = arith.addf %154, %164 : vector<8x128xf32>
    %166 = arith.mulf %164, %164 : vector<8x128xf32>
    %167 = arith.addf %156, %166 : vector<8x128xf32>
    %c42_57 = arith.constant 42 : index
    %168 = arith.index_cast %15 : i32 to index
    %c0_58 = arith.constant 0 : index
    %169 = vector.load %arg2[%c42_57, %168, %c0_58] : memref<51x8x128xf32, #tpu.memory_space<vmem>>, vector<3x8x128xf32>
    %c48 = arith.constant 48 : index
    %170 = arith.index_cast %15 : i32 to index
    %c0_59 = arith.constant 0 : index
    %171 = vector.load %arg2[%c48, %170, %c0_59] : memref<51x8x128xf32, #tpu.memory_space<vmem>>, vector<3x8x128xf32>
    %172 = arith.subf %169, %171 : vector<3x8x128xf32>
    %173 = arith.mulf %172, %172 : vector<3x8x128xf32>
    %cst_60 = arith.constant dense<0.000000e+00> : vector<8x128xf32>
    %174 = vector.multi_reduction <add>, %173, %cst_60 [0] : vector<3x8x128xf32> to vector<8x128xf32>
    %175 = math.sqrt %174 : vector<8x128xf32>
    %176 = arith.addf %165, %175 : vector<8x128xf32>
    %177 = arith.mulf %175, %175 : vector<8x128xf32>
    %178 = arith.addf %167, %177 : vector<8x128xf32>
    %c128_i32_61 = arith.constant 128 : i32
    %179 = arith.muli %15, %c128_i32_61 : i32
    %180 = vector.broadcast %179 : i32 to vector<8x128xi32>
    %181 = arith.addi %12, %180 : vector<8x128xi32>
    %c4_i32 = arith.constant 4 : i32
    %182 = vector.broadcast %c4_i32 : i32 to vector<8x128xi32>
    %183 = arith.cmpi slt, %181, %182 : vector<8x128xi32>
    %cst_62 = arith.constant 1.000000e+00 : f32
    %184 = vector.broadcast %cst_62 : f32 to vector<8x128xf32>
    %185 = arith.select %183, %176, %184 : vector<8x128xi1>, vector<8x128xf32>
    %cst_63 = arith.constant 1.000000e+00 : f32
    %186 = vector.broadcast %cst_63 : f32 to vector<8x128xf32>
    %187 = arith.divf %186, %185 : vector<8x128xf32>
    %cst_64 = arith.constant 2.250000e+02 : f32
    %188 = vector.broadcast %cst_64 : f32 to vector<8x128xf32>
    %189 = arith.mulf %188, %178 : vector<8x128xf32>
    %190 = arith.mulf %189, %187 : vector<8x128xf32>
    %191 = arith.mulf %190, %187 : vector<8x128xf32>
    %cst_65 = arith.constant 1.500000e+01 : f32
    %192 = vector.broadcast %cst_65 : f32 to vector<8x128xf32>
    %193 = arith.subf %191, %192 : vector<8x128xf32>
    %cst_66 = arith.constant 0.000000e+00 : f32
    %194 = vector.broadcast %cst_66 : f32 to vector<8x128xf32>
    %195 = arith.select %183, %193, %194 : vector<8x128xi1>, vector<8x128xf32>
    %196 = arith.addf %13, %195 : vector<8x128xf32>
    %c1_i32_67 = arith.constant 1 : i32
    %c0_68 = arith.constant 0 : index
    %c0_69 = arith.constant 0 : index
    %197 = vector.load %arg4[%c0_68, %c0_69] : memref<8x128xf32, #tpu.memory_space<vmem>>, vector<8x128xf32>
    %198 = arith.addf %197, %196 : vector<8x128xf32>
    %c0_70 = arith.constant 0 : index
    %c0_71 = arith.constant 0 : index
    %199 = vector.load %arg4[%c0_70, %c0_71] : memref<8x128xf32, #tpu.memory_space<vmem>>, vector<8x128xf32>
    tpu.vector_store %arg4[%c0_70, %c0_71], %198 {strides = array<i32>} : memref<8x128xf32, #tpu.memory_space<vmem>>, vector<8x128xf32>,
    %c0_i32_72 = arith.constant 0 : i32
    %200 = arith.cmpi eq, %arg1, %c0_i32_72 : i32
    %201 = arith.extui %200 : i1 to i32
    %c0_i32_73 = arith.constant 0 : i32
    %202 = arith.cmpi ne, %201, %c0_i32_73 : i32
    scf.if %202 {
      %c0_74 = arith.constant 0 : index
      %c0_75 = arith.constant 0 : index
      %203 = vector.load %arg4[%c0_74, %c0_75] : memref<8x128xf32, #tpu.memory_space<vmem>>, vector<8x128xf32>
      %204 = vector.shape_cast %203 : vector<8x128xf32> to vector<1x8x128xf32>
      %cst_76 = arith.constant dense<0.000000e+00> : vector<1xf32>
      %205 = vector.multi_reduction <add>, %204, %cst_76 [1, 2] : vector<1x8x128xf32> to vector<1xf32>
      %206 = vector.shape_cast %205 : vector<1xf32> to vector<1x1x1xf32>
      %207 = vector.extract %206[0, 0, 0] : f32 from vector<1x1x1xf32>
      %cst_77 = arith.constant 0.0166666675 : f32
      %208 = arith.mulf %207, %cst_77 : f32
      %c0_78 = arith.constant 0 : index
      %c0_79 = arith.constant 0 : index
      %209 = memref.load %arg3[%c0_78, %c0_79] : memref<1x1xf32, #tpu.memory_space<smem>>
      memref.store %208, %arg3[%c0_78, %c0_79] : memref<1x1xf32, #tpu.memory_space<smem>>
    } else {
    }
    return
  }
  func.func @transform_0(%arg0: i32, %arg1: i32) -> (i32, i32, i32) {
    %c1_i32 = arith.constant 1 : i32
    %0 = arith.muli %arg0, %c1_i32 : i32
    %1 = arith.addi %0, %arg1 : i32
    %c0_i32 = arith.constant 0 : i32
    %c0_i32_0 = arith.constant 0 : i32
    %c0_i32_1 = arith.constant 0 : i32
    return %c0_i32, %1, %c0_i32_0 : i32, i32, i32
  }
  func.func @transform_1(%arg0: i32, %arg1: i32) -> (i32, i32) {
    %c0_i32 = arith.constant 0 : i32
    %c0_i32_0 = arith.constant 0 : i32
    return %arg0, %c0_i32 : i32, i32
  }
}

</mosaic_0001>

<llo_original>
// kernel: v_len_loss.1
$region0: #{v_len_loss.1}
  #allocation0 [shape = 'u32[]', space=smem, size = 0x4, offset = 0x4, fixed_abs, tag = 'smem constant byte address 0x4 - core index']
  #allocation1 [shape = 'u32[144,128]{1,0:T(1,128)}', space=vmem, size = 0x12000, scoped, tag = 'internal scratch']
  #allocation2 [shape = 'f32[8,128]{1,0:T(8,128)}', space=vmem, size = 0x1000, scoped, tag = 'scratch operand']
  %s0 = inlined_call_operand.vmem [shape: f32[51,8,128], index: 0, kind: input, shape index: {}]
  %s1 = inlined_call_operand.hbm [shape: f32[1,1], index: 1, kind: output, shape index: {}]
  %s2 = sld [smem:[#allocation0]]
  $region22: #{v_len_loss.1} parent=0
    _
  %s4 = ssub.s32 1, %s2
  %s5 = scalar_select 0, %s4, %s2
  $region1: #{v_len_loss.1} parent=0
    #allocation3 [shape = 'u8[512]{0}', space=smem, size = 0x200, scoped, tag = 'output window, operand 0, single buffered']
    #allocation4 [shape = 's32[1]{0}', space=sflag, size = 0x4, scoped, tag = 'scoped memory for v_len_loss.1']
    %6 = vsyncpa [#allocation4], 0
    // Predicated region
    $region2: #{v_len_loss.1} parent=1 // pred_check
      _
    $region3: #{v_len_loss.1} parent=1 // pred_check_branch
      %8 = sbr.rel (0) target = $region5
    $region4: #{v_len_loss.1} parent=1 // pred_region
      %s9 = sadd.s32 0, 0
      %p10 = scmp.lt.s32.totalorder %s9, 0
      %s11 = scalar_select %p10, %s9, 0
      %s12 = smul.addr %s11, 8
      %s13 = scalar_lea.vmem %s0, %s12
      %s14 = sadd.s32 0, 0
    $region5: #{v_len_loss.1} parent=1 // pred_fallthru
      _
    %s15 = sadd.s32 0, 0
    %p16 = scmp.lt.s32.totalorder %s15, 0
    %s17 = scalar_select %p16, %s15, 0
    %s18 = smul.addr %s17, 8
    %s19 = scalar_lea.vmem %s0, %s18
    %s20 = sadd.s32 0, 0
    %p21 = scmp.lt.s32.totalorder %s20, 0
    %s22 = scalar_select %p21, %s20, 0
    %s23 = smul.addr %s22, 8
    %s24 = scalar_lea.vmem %s0, %s23
    %s25 = sadd.s32 0, 0
    %p26 = scmp.eq.s32.totalorder 0, 0
    // Predicated region
    $region6: #{v_len_loss.1} parent=1 // pred_check
      %p27 = pneg %p26
    $region7: #{v_len_loss.1} parent=1 // pred_check_branch
      %29 = sbr.rel (%p27) target = $region9
    $region8: #{v_len_loss.1} parent=1 // pred_region
      %30 = vst [vmem:[#allocation2] sm:$0xff] 0.0
      %s31 = scalar_lea.smem [#allocation3], 0
      %32 = sst [smem:[%s31]] 0.0
    $region9: #{v_len_loss.1} parent=1 // pred_fallthru
      _
    %s33 = sadd.s32 0, 0
    %s34 = smul.u32 %s33, 8
    %v35 = vlaneseq
    %v36 = vshrl.u32 %v35, 7
    %v37 = vlaneseq
    %v38 = vand.u32 %v37, 127
    %v39 = vstv %s34
    %v40 = vadd.s32 %v39, %v36
    %v41 = vmul.u32 %v40, 128
    %v42 = vadd.s32 %v41, %v38
    %v43 = vld [vmem:[%s24] sm:$0xff]
    %v44 = vld [vmem:[%s24 + $0x8] sm:$0xff]
    %v45 = vld [vmem:[%s24 + $0x10] sm:$0xff]
    %s46 = sadd.s32 0, 24
    %s47 = scalar_lea.vmem %s24, %s46
    %v48 = vld [vmem:[%s47] sm:$0xff]
    %v49 = vld [vmem:[%s47 + $0x8] sm:$0xff]
    %v50 = vld [vmem:[%s47 + $0x10] sm:$0xff]
    %v51 = vsub.f32 %v43, %v48
    %v52 = vsub.f32 %v44, %v49
    %v53 = vsub.f32 %v45, %v50
    %v54 = vmul.f32 %v51, %v51
    %v55 = vmul.f32 %v52, %v52
    %v56 = vmul.f32 %v53, %v53
    %v57 = vadd.f32 %v54, %v55
    %v58 = vadd.f32 %v57, %v56
    %v59 = vrsqrt.pop %v58
    %v60 = vmul.f32 %v58, %v59
    %vm61 = vcmp.eq.f32.partialorder %v58, inf
    %v62 = vsel %vm61, %v58, %v60
    %vm63 = vcmp.eq.f32.partialorder %v58, 0.0
    %v64 = vand.u32 %v58, 2147483648
    %v65 = vsel %vm63, %v64, %v62
    %v66 = vmul.f32 %v65, %v65
    %s67 = sadd.s32 0, 48
    %s68 = scalar_lea.vmem %s24, %s67
    %v69 = vld [vmem:[%s68] sm:$0xff]
    %v70 = vld [vmem:[%s68 + $0x8] sm:$0xff]
    %v71 = vld [vmem:[%s68 + $0x10] sm:$0xff]
    %v72 = vsub.f32 %v43, %v69
    %v73 = vsub.f32 %v44, %v70
    %v74 = vsub.f32 %v45, %v71
    %v75 = vmul.f32 %v72, %v72
    %v76 = vmul.f32 %v73, %v73
    %v77 = vmul.f32 %v74, %v74
    %v78 = vadd.f32 %v75, %v76
    %v79 = vadd.f32 %v78, %v77
    %v80 = vrsqrt.pop %v79
    %v81 = vmul.f32 %v79, %v80
    %vm82 = vcmp.eq.f32.partialorder %v79, inf
    %v83 = vsel %vm82, %v79, %v81
    %vm84 = vcmp.eq.f32.partialorder %v79, 0.0
    %v85 = vand.u32 %v79, 2147483648
    %v86 = vsel %vm84, %v85, %v83
    %v87 = vadd.f32 %v65, %v86
    %v88 = vmul.f32 %v86, %v86
    %v89 = vadd.f32 %v66, %v88
    %s90 = sadd.s32 0, 72
    %s91 = scalar_lea.vmem %s24, %s90
    %v92 = vld [vmem:[%s91] sm:$0xff]
    %v93 = vld [vmem:[%s91 + $0x8] sm:$0xff]
    %v94 = vld [vmem:[%s91 + $0x10] sm:$0xff]
    %v95 = vsub.f32 %v48, %v92
    %v96 = vsub.f32 %v49, %v93
    %v97 = vsub.f32 %v50, %v94
    %v98 = vmul.f32 %v95, %v95
    %v99 = vmul.f32 %v96, %v96
    %v100 = vmul.f32 %v97, %v97
    %v101 = vadd.f32 %v98, %v99
    %v102 = vadd.f32 %v101, %v100
    %v103 = vrsqrt.pop %v102
    %v104 = vmul.f32 %v102, %v103
    %vm105 = vcmp.eq.f32.partialorder %v102, inf
    %v106 = vsel %vm105, %v102, %v104
    %vm107 = vcmp.eq.f32.partialorder %v102, 0.0
    %v108 = vand.u32 %v102, 2147483648
    %v109 = vsel %vm107, %v108, %v106
    %v110 = vadd.f32 %v87, %v109
    %v111 = vmul.f32 %v109, %v109
    %v112 = vadd.f32 %v89, %v111
    %s113 = sadd.s32 0, 96
    %s114 = scalar_lea.vmem %s24, %s113
    %v115 = vld [vmem:[%s114] sm:$0xff]
    %v116 = vld [vmem:[%s114 + $0x8] sm:$0xff]
    %v117 = vld [vmem:[%s114 + $0x10] sm:$0xff]
    %v118 = vsub.f32 %v69, %v115
    %v119 = vsub.f32 %v70, %v116
    %v120 = vsub.f32 %v71, %v117
    %v121 = vmul.f32 %v118, %v118
    %v122 = vmul.f32 %v119, %v119
    %v123 = vmul.f32 %v120, %v120
    %v124 = vadd.f32 %v121, %v122
    %v125 = vadd.f32 %v124, %v123
    %v126 = vrsqrt.pop %v125
    %v127 = vmul.f32 %v125, %v126
    %vm128 = vcmp.eq.f32.partialorder %v125, inf
    %v129 = vsel %vm128, %v125, %v127
    %vm130 = vcmp.eq.f32.partialorder %v125, 0.0
    %v131 = vand.u32 %v125, 2147483648
    %v132 = vsel %vm130, %v131, %v129
    %v133 = vadd.f32 %v110, %v132
    %v134 = vmul.f32 %v132, %v132
    %v135 = vadd.f32 %v112, %v134
    %s136 = sadd.s32 0, 120
    %s137 = scalar_lea.vmem %s24, %s136
    %v138 = vld [vmem:[%s137] sm:$0xff]
    %v139 = vld [vmem:[%s137 + $0x8] sm:$0xff]
    %v140 = vld [vmem:[%s137 + $0x10] sm:$0xff]
    %s141 = sadd.s32 0, 144
    %s142 = scalar_lea.vmem %s24, %s141
    %v143 = vld [vmem:[%s142] sm:$0xff]
    %v144 = vld [vmem:[%s142 + $0x8] sm:$0xff]
    %v145 = vld [vmem:[%s142 + $0x10] sm:$0xff]
    %v146 = vsub.f32 %v138, %v143
    %v147 = vsub.f32 %v139, %v144
    %v148 = vsub.f32 %v140, %v145
    %v149 = vmul.f32 %v146, %v146
    %v150 = vmul.f32 %v147, %v147
    %v151 = vmul.f32 %v148, %v148
    %v152 = vadd.f32 %v149, %v150
    %v153 = vadd.f32 %v152, %v151
    %v154 = vrsqrt.pop %v153
    %v155 = vmul.f32 %v153, %v154
    %vm156 = vcmp.eq.f32.partialorder %v153, inf
    %v157 = vsel %vm156, %v153, %v155
    %vm158 = vcmp.eq.f32.partialorder %v153, 0.0
    %v159 = vand.u32 %v153, 2147483648
    %v160 = vsel %vm158, %v159, %v157
    %v161 = vadd.f32 %v133, %v160
    %v162 = vmul.f32 %v160, %v160
    %v163 = vadd.f32 %v135, %v162
    %s164 = sadd.s32 0, 168
    %s165 = scalar_lea.vmem %s24, %s164
    %v166 = vld [vmem:[%s165] sm:$0xff]
    %v167 = vld [vmem:[%s165 + $0x8] sm:$0xff]
    %v168 = vld [vmem:[%s165 + $0x10] sm:$0xff]
    %v169 = vsub.f32 %v138, %v166
    %v170 = vsub.f32 %v139, %v167
    %v171 = vsub.f32 %v140, %v168
    %v172 = vmul.f32 %v169, %v169
    %v173 = vmul.f32 %v170, %v170
    %v174 = vmul.f32 %v171, %v171
    %v175 = vadd.f32 %v172, %v173
    %v176 = vadd.f32 %v175, %v174
    %v177 = vrsqrt.pop %v176
    %v178 = vmul.f32 %v176, %v177
    %vm179 = vcmp.eq.f32.partialorder %v176, inf
    %v180 = vsel %vm179, %v176, %v178
    %vm181 = vcmp.eq.f32.partialorder %v176, 0.0
    %v182 = vand.u32 %v176, 2147483648
    %v183 = vsel %vm181, %v182, %v180
    %v184 = vadd.f32 %v161, %v183
    %v185 = vmul.f32 %v183, %v183
    %v186 = vadd.f32 %v163, %v185
    %s187 = sadd.s32 0, 192
    %s188 = scalar_lea.vmem %s24, %s187
    %v189 = vld [vmem:[%s188] sm:$0xff]
    %v190 = vld [vmem:[%s188 + $0x8] sm:$0xff]
    %v191 = vld [vmem:[%s188 + $0x10] sm:$0xff]
    %v192 = vsub.f32 %v143, %v189
    %v193 = vsub.f32 %v144, %v190
    %v194 = vsub.f32 %v145, %v191
    %v195 = vmul.f32 %v192, %v192
    %v196 = vmul.f32 %v193, %v193
    %v197 = vmul.f32 %v194, %v194
    %v198 = vadd.f32 %v195, %v196
    %v199 = vadd.f32 %v198, %v197
    %v200 = vrsqrt.pop %v199
    %v201 = vmul.f32 %v199, %v200
    %vm202 = vcmp.eq.f32.partialorder %v199, inf
    %v203 = vsel %vm202, %v199, %v201
    %vm204 = vcmp.eq.f32.partialorder %v199, 0.0
    %v205 = vand.u32 %v199, 2147483648
    %v206 = vsel %vm204, %v205, %v203
    %v207 = vadd.f32 %v184, %v206
    %v208 = vmul.f32 %v206, %v206
    %v209 = vadd.f32 %v186, %v208
    %s210 = sadd.s32 0, 216
    %s211 = scalar_lea.vmem %s24, %s210
    %v212 = vld [vmem:[%s211] sm:$0xff]
    %v213 = vld [vmem:[%s211 + $0x8] sm:$0xff]
    %v214 = vld [vmem:[%s211 + $0x10] sm:$0xff]
    %v215 = vsub.f32 %v166, %v212
    %v216 = vsub.f32 %v167, %v213
    %v217 = vsub.f32 %v168, %v214
    %v218 = vmul.f32 %v215, %v215
    %v219 = vmul.f32 %v216, %v216
    %v220 = vmul.f32 %v217, %v217
    %v221 = vadd.f32 %v218, %v219
    %v222 = vadd.f32 %v221, %v220
    %v223 = vrsqrt.pop %v222
    %v224 = vmul.f32 %v222, %v223
    %vm225 = vcmp.eq.f32.partialorder %v222, inf
    %v226 = vsel %vm225, %v222, %v224
    %vm227 = vcmp.eq.f32.partialorder %v222, 0.0
    %v228 = vand.u32 %v222, 2147483648
    %v229 = vsel %vm227, %v228, %v226
    %v230 = vadd.f32 %v207, %v229
    %v231 = vmul.f32 %v229, %v229
    %v232 = vadd.f32 %v209, %v231
    %s233 = sadd.s32 0, 240
    %s234 = scalar_lea.vmem %s24, %s233
    %v235 = vld [vmem:[%s234] sm:$0xff]
    %v236 = vld [vmem:[%s234 + $0x8] sm:$0xff]
    %v237 = vld [vmem:[%s234 + $0x10] sm:$0xff]
    %v238 = vsub.f32 %v189, %v235
    %v239 = vsub.f32 %v190, %v236
    %v240 = vsub.f32 %v191, %v237
    %v241 = vmul.f32 %v238, %v238
    %v242 = vmul.f32 %v239, %v239
    %v243 = vmul.f32 %v240, %v240
    %v244 = vadd.f32 %v241, %v242
    %v245 = vadd.f32 %v244, %v243
    %v246 = vrsqrt.pop %v245
    %v247 = vmul.f32 %v245, %v246
    %vm248 = vcmp.eq.f32.partialorder %v245, inf
    %v249 = vsel %vm248, %v245, %v247
    %vm250 = vcmp.eq.f32.partialorder %v245, 0.0
    %v251 = vand.u32 %v245, 2147483648
    %v252 = vsel %vm250, %v251, %v249
    %v253 = vadd.f32 %v230, %v252
    %v254 = vmul.f32 %v252, %v252
    %v255 = vadd.f32 %v232, %v254
    %s256 = sadd.s32 0, 264
    %s257 = scalar_lea.vmem %s24, %s256
    %v258 = vld [vmem:[%s257] sm:$0xff]
    %v259 = vld [vmem:[%s257 + $0x8] sm:$0xff]
    %v260 = vld [vmem:[%s257 + $0x10] sm:$0xff]
    %v261 = vsub.f32 %v138, %v258
    %v262 = vsub.f32 %v139, %v259
    %v263 = vsub.f32 %v140, %v260
    %v264 = vmul.f32 %v261, %v261
    %v265 = vmul.f32 %v262, %v262
    %v266 = vmul.f32 %v263, %v263
    %v267 = vadd.f32 %v264, %v265
    %v268 = vadd.f32 %v267, %v266
    %v269 = vrsqrt.pop %v268
    %v270 = vmul.f32 %v268, %v269
    %vm271 = vcmp.eq.f32.partialorder %v268, inf
    %v272 = vsel %vm271, %v268, %v270
    %vm273 = vcmp.eq.f32.partialorder %v268, 0.0
    %v274 = vand.u32 %v268, 2147483648
    %v275 = vsel %vm273, %v274, %v272
    %v276 = vadd.f32 %v253, %v275
    %v277 = vmul.f32 %v275, %v275
    %v278 = vadd.f32 %v255, %v277
    %s279 = sadd.s32 0, 288
    %s280 = scalar_lea.vmem %s24, %s279
    %v281 = vld [vmem:[%s280] sm:$0xff]
    %v282 = vld [vmem:[%s280 + $0x8] sm:$0xff]
    %v283 = vld [vmem:[%s280 + $0x10] sm:$0xff]
    %v284 = vsub.f32 %v143, %v281
    %v285 = vsub.f32 %v144, %v282
    %v286 = vsub.f32 %v145, %v283
    %v287 = vmul.f32 %v284, %v284
    %v288 = vmul.f32 %v285, %v285
    %v289 = vmul.f32 %v286, %v286
    %v290 = vadd.f32 %v287, %v288
    %v291 = vadd.f32 %v290, %v289
    %v292 = vrsqrt.pop %v291
    %v293 = vmul.f32 %v291, %v292
    %vm294 = vcmp.eq.f32.partialorder %v291, inf
    %v295 = vsel %vm294, %v291, %v293
    %vm296 = vcmp.eq.f32.partialorder %v291, 0.0
    %v297 = vand.u32 %v291, 2147483648
    %v298 = vsel %vm296, %v297, %v295
    %v299 = vadd.f32 %v276, %v298
    %v300 = vmul.f32 %v298, %v298
    %v301 = vadd.f32 %v278, %v300
    %s302 = sadd.s32 0, 312
    %s303 = scalar_lea.vmem %s24, %s302
    %v304 = vld [vmem:[%s303] sm:$0xff]
    %v305 = vld [vmem:[%s303 + $0x8] sm:$0xff]
    %v306 = vld [vmem:[%s303 + $0x10] sm:$0xff]
    %v307 = vsub.f32 %v258, %v304
    %v308 = vsub.f32 %v259, %v305
    %v309 = vsub.f32 %v260, %v306
    %v310 = vmul.f32 %v307, %v307
    %v311 = vmul.f32 %v308, %v308
    %v312 = vmul.f32 %v309, %v309
    %v313 = vadd.f32 %v310, %v311
    %v314 = vadd.f32 %v313, %v312
    %v315 = vrsqrt.pop %v314
    %v316 = vmul.f32 %v314, %v315
    %vm317 = vcmp.eq.f32.partialorder %v314, inf
    %v318 = vsel %vm317, %v314, %v316
    %vm319 = vcmp.eq.f32.partialorder %v314, 0.0
    %v320 = vand.u32 %v314, 2147483648
    %v321 = vsel %vm319, %v320, %v318
    %v322 = vadd.f32 %v299, %v321
    %v323 = vmul.f32 %v321, %v321
    %v324 = vadd.f32 %v301, %v323
    %s325 = sadd.s32 0, 336
    %s326 = scalar_lea.vmem %s24, %s325
    %v327 = vld [vmem:[%s326] sm:$0xff]
    %v328 = vld [vmem:[%s326 + $0x8] sm:$0xff]
    %v329 = vld [vmem:[%s326 + $0x10] sm:$0xff]
    %v330 = vsub.f32 %v281, %v327
    %v331 = vsub.f32 %v282, %v328
    %v332 = vsub.f32 %v283, %v329
    %v333 = vmul.f32 %v330, %v330
    %v334 = vmul.f32 %v331, %v331
    %v335 = vmul.f32 %v332, %v332
    %v336 = vadd.f32 %v333, %v334
    %v337 = vadd.f32 %v336, %v335
    %v338 = vrsqrt.pop %v337
    %v339 = vmul.f32 %v337, %v338
    %vm340 = vcmp.eq.f32.partialorder %v337, inf
    %v341 = vsel %vm340, %v337, %v339
    %vm342 = vcmp.eq.f32.partialorder %v337, 0.0
    %v343 = vand.u32 %v337, 2147483648
    %v344 = vsel %vm342, %v343, %v341
    %v345 = vadd.f32 %v322, %v344
    %v346 = vmul.f32 %v344, %v344
    %v347 = vadd.f32 %v324, %v346
    %s348 = sadd.s32 0, 360
    %s349 = scalar_lea.vmem %s24, %s348
    %v350 = vld [vmem:[%s349] sm:$0xff]
    %v351 = vld [vmem:[%s349 + $0x8] sm:$0xff]
    %v352 = vld [vmem:[%s349 + $0x10] sm:$0xff]
    %v353 = vsub.f32 %v304, %v350
    %v354 = vsub.f32 %v305, %v351
    %v355 = vsub.f32 %v306, %v352
    %v356 = vmul.f32 %v353, %v353
    %v357 = vmul.f32 %v354, %v354
    %v358 = vmul.f32 %v355, %v355
    %v359 = vadd.f32 %v356, %v357
    %v360 = vadd.f32 %v359, %v358
    %v361 = vrsqrt.pop %v360
    %v362 = vmul.f32 %v360, %v361
    %vm363 = vcmp.eq.f32.partialorder %v360, inf
    %v364 = vsel %vm363, %v360, %v362
    %vm365 = vcmp.eq.f32.partialorder %v360, 0.0
    %v366 = vand.u32 %v360, 2147483648
    %v367 = vsel %vm365, %v366, %v364
    %v368 = vadd.f32 %v345, %v367
    %v369 = vmul.f32 %v367, %v367
    %v370 = vadd.f32 %v347, %v369
    %s371 = sadd.s32 0, 384
    %s372 = scalar_lea.vmem %s24, %s371
    %v373 = vld [vmem:[%s372] sm:$0xff]
    %v374 = vld [vmem:[%s372 + $0x8] sm:$0xff]
    %v375 = vld [vmem:[%s372 + $0x10] sm:$0xff]
    %v376 = vsub.f32 %v327, %v373
    %v377 = vsub.f32 %v328, %v374
    %v378 = vsub.f32 %v329, %v375
    %v379 = vmul.f32 %v376, %v376
    %v380 = vmul.f32 %v377, %v377
    %v381 = vmul.f32 %v378, %v378
    %v382 = vadd.f32 %v379, %v380
    %v383 = vadd.f32 %v382, %v381
    %v384 = vrsqrt.pop %v383
    %v385 = vmul.f32 %v383, %v384
    %vm386 = vcmp.eq.f32.partialorder %v383, inf
    %v387 = vsel %vm386, %v383, %v385
    %vm388 = vcmp.eq.f32.partialorder %v383, 0.0
    %v389 = vand.u32 %v383, 2147483648
    %v390 = vsel %vm388, %v389, %v387
    %v391 = vadd.f32 %v368, %v390
    %v392 = vmul.f32 %v390, %v390
    %v393 = vadd.f32 %v370, %v392
    %s394 = smul.u32 0, 128
    %v395 = vstv %s394
    %v396 = vadd.s32 %v42, %v395
    %vm397 = vcmp.lt.s32.totalorder %v396, 4
    %v398 = vsel %vm397, %v391, 1.0
    %v399 = vrcp.pop %v398
    %v400 = vmul.f32 1.0, %v399
    %v401 = vmul.f32 %v393, 225.0
    %v402 = vmul.f32 %v401, %v400
    %v403 = vmul.f32 %v402, %v400
    %v404 = vsub.f32 %v403, 15.0
    %v405 = vsel %vm397, %v404, 0.0
    %v406 = vadd.f32 %v405, 0.0
    %v407 = vld [vmem:[#allocation2] sm:$0xff]
    %v408 = vadd.f32 %v407, %v406
    %409 = vst [vmem:[#allocation2] sm:$0xff] %v408
    // Predicated region
    $region10: #{v_len_loss.1} parent=1 // pred_check
      %p410 = pneg %p26
    $region11: #{v_len_loss.1} parent=1 // pred_check_branch
      %412 = sbr.rel (%p410) target = $region13
    $region12: #{v_len_loss.1} parent=1 // pred_region
      %v413 = vld [vmem:[#allocation2] sm:$0xff]
      %414 = vadd.xlane.f32.xlu0 %v413
      %v415 = vpop.xlane.xlu0 %414
      %v416 = vrot.slane %v415, 4
      %v417 = vadd.f32 %v415, %v416
      %v418 = vrot.slane %v417, 2
      %v419 = vadd.f32 %v417, %v418
      %v420 = vrot.slane %v419, 1
      %v421 = vadd.f32 %v419, %v420
      %s422 = vtos %v421
      %s423 = smul.f32 %s422, 0.016666668
      %s424 = scalar_lea.smem [#allocation3], 0
      %425 = sst [smem:[%s424]] %s423
    $region13: #{v_len_loss.1} parent=1 // pred_fallthru
      _
    // Predicated region
    $region14: #{v_len_loss.1} parent=1 // pred_check
      _
    $region15: #{v_len_loss.1} parent=1 // pred_check_branch
      %427 = sbr.rel (0) target = $region17
    $region16: #{v_len_loss.1} parent=1 // pred_region
      %s429 = ssub.s32 16, 16
      %430 = vsyncadd [#allocation4], %s429
      %433 = dma.smem_to_hbm [#allocation3], 16, %s1, [#allocation4]
    $region17: #{v_len_loss.1} parent=1 // pred_fallthru
      _
    // Predicated region
    $region18: #{v_len_loss.1} parent=1 // pred_check
      _
    $region19: #{v_len_loss.1} parent=1 // pred_check_branch
      %435 = sbr.rel (0) target = $region21
    $region20: #{v_len_loss.1} parent=1 // pred_region
      %436 = dma.done [#allocation4], 16
    $region21: #{v_len_loss.1} parent=1 // pred_fallthru
      _
    %437 = sfence
    %438 = vsyncpa [#allocation4], 1

</llo_original>
